<compile_context>
chip_gen: v7x
topology: tpu7x:2x2x1
jax: 0.10.0
libtpu: 0.0.40
codegen_flags: <defaults>
</compile_context>

<pallas_src>
import functools

import jax
import jax.numpy as jnp
from jax.experimental import pallas as pl
from jax.experimental.pallas import tpu as pltpu


def _round_up(n, m):
    return ((n + m - 1) // m) * m


def _mish(x):
    # mish(x) = x * tanh(softplus(x)); jax.nn.softplus is numerically stable.
    # tanh / softplus lower to EUP ops -> separate issue slot from the VPU.
    return x * jnp.tanh(jax.nn.softplus(x))


def mlp2_kernel(seed_ref, x_ref, w1_ref, b1_ref, w2_ref, b2_ref, o_ref, *,
                apply_final_act, dropout_p):
    # ---- linear1 (MXU, bf16 inputs, f32 accumulation) ----
    h = jnp.dot(x_ref[...].astype(jnp.bfloat16), w1_ref[...],
                preferred_element_type=jnp.float32)
    h = h + b1_ref[...]

    # ---- activation (mish), f32 epilogue ----
    h = _mish(h)

    # ---- dropout (torch.nn.functional.dropout default: p=0.5, training) ----
    # Counter-based hash RNG: unique per (seed, global element index), so every
    # batch tile gets an independent mask and the result does not depend on the
    # tiling.  Threshold compare is correct for any dropout_p
    # (keep w.p. 1-p, scale kept elements by 1/(1-p)).
    if dropout_p > 0.0:
        tb, hdim = h.shape
        rows = jax.lax.broadcasted_iota(jnp.int32, h.shape, 0)
        cols = jax.lax.broadcasted_iota(jnp.int32, h.shape, 1)
        gidx = (rows + pl.program_id(0) * tb) * hdim + cols
        u = gidx.astype(jnp.uint32) + (
            seed_ref[0].astype(jnp.uint32) * jnp.uint32(0x9E3779B9))
        # lowbias32 integer hash (xor-shift-multiply), pure VPU integer ops.
        u = u ^ (u >> 16)
        u = u * jnp.uint32(0x7FEB352D)
        u = u ^ (u >> 15)
        u = u * jnp.uint32(0x846CA68B)
        u = u ^ (u >> 16)
        thr = jnp.uint32(min(int(round(dropout_p * 4294967296.0)), 4294967295))
        scale = jnp.float32(1.0 / (1.0 - dropout_p))
        h = jnp.where(u >= thr, h * scale, jnp.float32(0.0))

    # ---- linear2 (MXU) ----
    y = jnp.dot(h.astype(jnp.bfloat16), w2_ref[...],
                preferred_element_type=jnp.float32)
    y = y + b2_ref[...]

    # ---- optional final activation ----
    if apply_final_act:
        y = _mish(y)

    o_ref[...] = y.astype(o_ref.dtype)


def mlp2_forward(x, w1, b1, w2, b2, seed, *, final_activation=False,
                 dropout_p=0.5, block_b=256):
    """Fused MLP2 forward.

    x: (B, D_in); w1: (D_in, H); b1: (H,); w2: (H, D_out); b2: (D_out,);
    seed: int32 array of shape (1,) controlling the dropout mask.
    """
    # TODO(synk): torch allows `final_activation` to be an arbitrary callable;
    # only the boolean (mish) variant is implemented here.
    B, D_in = x.shape
    H = w1.shape[1]
    D_out = w2.shape[1]

    # Lane-dense padding: feature dims up to multiples of 128.
    D_in_p = _round_up(D_in, 128)
    H_p = _round_up(H, 128)
    D_out_p = _round_up(D_out, 128)

    # Batch tile: multiple of 8 sublanes, up to `block_b` rows per grid step.
    TB = min(block_b, _round_up(B, 8))
    B_p = _round_up(B, TB)

    xp = jnp.pad(x, ((0, B_p - B), (0, D_in_p - D_in)))
    w1p = jnp.pad(w1, ((0, D_in_p - D_in), (0, H_p - H))).astype(jnp.bfloat16)
    b1p = jnp.pad(b1.reshape(1, -1).astype(jnp.float32),
                  ((0, 0), (0, H_p - H)))
    w2p = jnp.pad(w2, ((0, H_p - H), (0, D_out_p - D_out))).astype(jnp.bfloat16)
    b2p = jnp.pad(b2.reshape(1, -1).astype(jnp.float32),
                  ((0, 0), (0, D_out_p - D_out)))

    grid = (B_p // TB,)
    kernel = functools.partial(mlp2_kernel,
                               apply_final_act=bool(final_activation),
                               dropout_p=float(dropout_p))

    flops = 2 * B_p * (D_in_p * H_p + H_p * D_out_p)
    transcendentals = 2 * B_p * (H_p + (D_out_p if final_activation else 0))
    bytes_accessed = (xp.size * xp.dtype.itemsize
                      + w1p.size * 2 + w2p.size * 2
                      + b1p.size * 4 + b2p.size * 4
                      + B_p * D_out_p * x.dtype.itemsize)

    out = pl.pallas_call(
        kernel,
        out_shape=jax.ShapeDtypeStruct((B_p, D_out_p), x.dtype),
        grid_spec=pltpu.PrefetchScalarGridSpec(
            num_scalar_prefetch=1,                    # seed -> SMEM
            grid=grid,
            in_specs=[
                # x: tiled over batch (auto double-buffered pipeline).
                pl.BlockSpec((TB, D_in_p), lambda i, seed: (i, 0)),
                # Weights / biases: constant index_map -> fetched once,
                # VMEM-resident across all grid iterations.
                pl.BlockSpec((D_in_p, H_p), lambda i, seed: (0, 0)),
                pl.BlockSpec((1, H_p), lambda i, seed: (0, 0)),
                pl.BlockSpec((H_p, D_out_p), lambda i, seed: (0, 0)),
                pl.BlockSpec((1, D_out_p), lambda i, seed: (0, 0)),
            ],
            out_specs=pl.BlockSpec((TB, D_out_p), lambda i, seed: (i, 0)),
        ),
        compiler_params=pltpu.CompilerParams(
            dimension_semantics=("parallel",),        # megacore on v7x
            vmem_limit_bytes=48 * 1024 * 1024,        # headroom under v7x 64 MiB
        ),
        cost_estimate=pl.CostEstimate(flops=flops,
                                      transcendentals=transcendentals,
                                      bytes_accessed=bytes_accessed),
    )(seed, xp, w1p, b1p, w2p, b2p)

    return out[:B, :D_out]


def mlp2_reference_nodrop(x, w1, b1, w2, b2, final_activation=False):
    """Pure-JAX f32 reference with dropout disabled (numerical sanity check)."""
    h = x @ w1 + b1
    h = h * jnp.tanh(jax.nn.softplus(h))
    y = h @ w2 + b2
    if final_activation:
        y = y * jnp.tanh(jax.nn.softplus(y))
    return y


def init_params(key, in_dim, intermediate_dim, output_dim, dtype=jnp.float32):
    """Deterministic init mirroring torch.nn.Linear (uniform +-1/sqrt(fan_in))."""
    k1, k2, k3, k4 = jax.random.split(key, 4)
    lim1 = 1.0 / jnp.sqrt(in_dim)
    lim2 = 1.0 / jnp.sqrt(intermediate_dim)
    w1 = jax.random.uniform(k1, (in_dim, intermediate_dim), dtype, -lim1, lim1)
    b1 = jax.random.uniform(k2, (intermediate_dim,), dtype, -lim1, lim1)
    w2 = jax.random.uniform(k3, (intermediate_dim, output_dim), dtype, -lim2, lim2)
    b2 = jax.random.uniform(k4, (output_dim,), dtype, -lim2, lim2)
    return w1, b1, w2, b2


if __name__ == "__main__":
    key = jax.random.PRNGKey(0)
    kx, kp = jax.random.split(key)

    # Small shapes implied by the forward: x (batch, features); LazyLinear
    # infers in_dim from x.
    B, D_IN, HIDDEN, D_OUT = 8, 32, 64, 16

    x = jax.random.normal(kx, (B, D_IN), dtype=jnp.float32)
    w1, b1, w2, b2 = init_params(kp, D_IN, HIDDEN, D_OUT)
    seed = jnp.array([42], dtype=jnp.int32)  # deterministic dropout seed

    # 1) Training-mode forward (dropout p=0.5, as torch.nn.functional.dropout).
    out = mlp2_forward(x, w1, b1, w2, b2, seed, final_activation=False)
    jax.block_until_ready(out)
    assert out.shape == (B, D_OUT)
    assert bool(jnp.all(jnp.isfinite(out)))

    # 2) Numerical sanity with dropout disabled vs. pure-JAX f32 reference
    #    (bf16 MXU inputs, f32 accumulation -> loose tolerance).
    out_nd = mlp2_forward(x, w1, b1, w2, b2, seed, final_activation=False,
                          dropout_p=0.0)
    ref_nd = mlp2_reference_nodrop(x, w1, b1, w2, b2, final_activation=False)
    jax.block_until_ready(out_nd)
    max_err = float(jnp.max(jnp.abs(out_nd - ref_nd)))
    assert max_err < 1e-1, f"max abs error {max_err}"

    # 3) Exercise the final_activation branch.
    out_fa = mlp2_forward(x, w1, b1, w2, b2, seed, final_activation=True)
    jax.block_until_ready(out_fa)
    assert out_fa.shape == (B, D_OUT)
    assert bool(jnp.all(jnp.isfinite(out_fa)))

    print("KERNEL_OK")
</pallas_src>

<mosaic_0001>
module attributes {stable_mosaic.version = 11 : i64} {
  func.func @mlp2_kernel(%arg0: i32, %arg1: memref<1xi32, #tpu.memory_space<smem>>, %arg2: memref<8x128xf32, #tpu.memory_space<vmem>>, %arg3: memref<128x128xbf16, #tpu.memory_space<vmem>>, %arg4: memref<1x128xf32, #tpu.memory_space<vmem>>, %arg5: memref<128x128xbf16, #tpu.memory_space<vmem>>, %arg6: memref<1x128xf32, #tpu.memory_space<vmem>>, %arg7: memref<8x128xf32, #tpu.memory_space<vmem>>) attributes {dimension_semantics = [#tpu.dimension_semantics<parallel>], iteration_bounds = array<i64: 1>, scalar_prefetch = 1 : i64, scratch_operands = 0 : i64, tpu.core_type = #tpu.core_type<tc>, window_params = [{transform_indices = @transform_0, window_bounds = array<i64: 8, 128>}, {pipeline_mode = #tpu.pipeline_mode<synchronous>, transform_indices = @transform_1, window_bounds = array<i64: 128, 128>}, {pipeline_mode = #tpu.pipeline_mode<synchronous>, transform_indices = @transform_2, window_bounds = array<i64: 1, 128>}, {pipeline_mode = #tpu.pipeline_mode<synchronous>, transform_indices = @transform_3, window_bounds = array<i64: 128, 128>}, {pipeline_mode = #tpu.pipeline_mode<synchronous>, transform_indices = @transform_4, window_bounds = array<i64: 1, 128>}, {transform_indices = @transform_5, window_bounds = array<i64: 8, 128>}]} {
    %c0 = arith.constant 0 : index
    %c0_0 = arith.constant 0 : index
    %0 = vector.load %arg2[%c0, %c0_0] : memref<8x128xf32, #tpu.memory_space<vmem>>, vector<8x128xf32>
    %1 = arith.truncf %0 : vector<8x128xf32> to vector<8x128xbf16>
    %c0_1 = arith.constant 0 : index
    %c0_2 = arith.constant 0 : index
    %2 = vector.load %arg3[%c0_1, %c0_2] : memref<128x128xbf16, #tpu.memory_space<vmem>>, vector<128x128xbf16>
    %cst = arith.constant dense<0.000000e+00> : vector<8x128xf32>
    %3 = tpu.matmul %1, %2, %cst {dimension_numbers = #tpu.dot_dimension_numbers<[1], [0], [0], [1], [0, 0, 1, 1], [], []>} : vector<8x128xbf16>, vector<128x128xbf16>, vector<8x128xf32> -> vector<8x128xf32>
    %c0_3 = arith.constant 0 : index
    %c0_4 = arith.constant 0 : index
    %4 = vector.load %arg4[%c0_3, %c0_4] : memref<1x128xf32, #tpu.memory_space<vmem>>, vector<1x128xf32>
    %5 = vector.broadcast %4 : vector<1x128xf32> to vector<8x128xf32>
    %6 = arith.addf %3, %5 : vector<8x128xf32>
    %cst_5 = arith.constant 0.000000e+00 : f32
    %7 = vector.broadcast %cst_5 : f32 to vector<8x128xf32>
    %8 = arith.maximumf %6, %7 : vector<8x128xf32>
    %9 = vector.broadcast %cst_5 : f32 to vector<8x128xf32>
    %10 = arith.subf %6, %9 : vector<8x128xf32>
    %11 = arith.cmpf one, %10, %10 : vector<8x128xf32>
    %12 = vector.broadcast %cst_5 : f32 to vector<8x128xf32>
    %13 = arith.addf %6, %12 : vector<8x128xf32>
    %14 = math.absf %10 : vector<8x128xf32>
    %cst_6 = arith.constant 0.000000e+00 : f32
    %15 = vector.broadcast %cst_6 : f32 to vector<8x128xf32>
    %16 = arith.subf %15, %14 : vector<8x128xf32>
    %17 = math.exp %16 : vector<8x128xf32>
    %18 = math.log1p %17 : vector<8x128xf32>
    %19 = arith.addf %8, %18 : vector<8x128xf32>
    %20 = arith.select %11, %13, %19 : vector<8x128xi1>, vector<8x128xf32>
    %21 = math.tanh %20 : vector<8x128xf32>
    %22 = arith.mulf %6, %21 : vector<8x128xf32>
    %23 = tpu.iota {dimensions = array<i32: 0>} : vector<8x128xi32>
    %24 = tpu.iota {dimensions = array<i32: 1>} : vector<8x128xi32>
    %c8_i32 = arith.constant 8 : i32
    %25 = arith.muli %arg0, %c8_i32 : i32
    %26 = vector.broadcast %25 : i32 to vector<8x128xi32>
    %27 = arith.addi %23, %26 : vector<8x128xi32>
    %c128_i32 = arith.constant 128 : i32
    %28 = vector.broadcast %c128_i32 : i32 to vector<8x128xi32>
    %29 = arith.muli %27, %28 : vector<8x128xi32>
    %30 = arith.addi %29, %24 : vector<8x128xi32>
    %c0_7 = arith.constant 0 : index
    %31 = memref.load %arg1[%c0_7] : memref<1xi32, #tpu.memory_space<smem>>
    %c-1640531527_i32 = arith.constant -1640531527 : i32
    %32 = arith.muli %31, %c-1640531527_i32 : i32
    %33 = vector.broadcast %32 : i32 to vector<8x128xi32>
    %34 = arith.addi %30, %33 : vector<8x128xi32>
    %c16_i32 = arith.constant 16 : i32
    %35 = vector.broadcast %c16_i32 : i32 to vector<8x128xi32>
    %36 = arith.shrui %34, %35 : vector<8x128xi32>
    %37 = arith.xori %34, %36 : vector<8x128xi32>
    %c2146121005_i32 = arith.constant 2146121005 : i32
    %38 = vector.broadcast %c2146121005_i32 : i32 to vector<8x128xi32>
    %39 = arith.muli %37, %38 : vector<8x128xi32>
    %c15_i32 = arith.constant 15 : i32
    %40 = vector.broadcast %c15_i32 : i32 to vector<8x128xi32>
    %41 = arith.shrui %39, %40 : vector<8x128xi32>
    %42 = arith.xori %39, %41 : vector<8x128xi32>
    %c-2073254261_i32 = arith.constant -2073254261 : i32
    %43 = vector.broadcast %c-2073254261_i32 : i32 to vector<8x128xi32>
    %44 = arith.muli %42, %43 : vector<8x128xi32>
    %c16_i32_8 = arith.constant 16 : i32
    %45 = vector.broadcast %c16_i32_8 : i32 to vector<8x128xi32>
    %46 = arith.shrui %44, %45 : vector<8x128xi32>
    %47 = arith.xori %44, %46 : vector<8x128xi32>
    %c-2147483648_i32 = arith.constant -2147483648 : i32
    %48 = vector.broadcast %c-2147483648_i32 : i32 to vector<8x128xi32>
    %49 = arith.cmpi uge, %47, %48 : vector<8x128xi32>
    %cst_9 = arith.constant 2.000000e+00 : f32
    %50 = vector.broadcast %cst_9 : f32 to vector<8x128xf32>
    %51 = arith.mulf %22, %50 : vector<8x128xf32>
    %cst_10 = arith.constant 0.000000e+00 : f32
    %52 = vector.broadcast %cst_10 : f32 to vector<8x128xf32>
    %53 = arith.select %49, %51, %52 : vector<8x128xi1>, vector<8x128xf32>
    %54 = arith.truncf %53 : vector<8x128xf32> to vector<8x128xbf16>
    %c0_11 = arith.constant 0 : index
    %c0_12 = arith.constant 0 : index
    %55 = vector.load %arg5[%c0_11, %c0_12] : memref<128x128xbf16, #tpu.memory_space<vmem>>, vector<128x128xbf16>
    %cst_13 = arith.constant dense<0.000000e+00> : vector<8x128xf32>
    %56 = tpu.matmul %54, %55, %cst_13 {dimension_numbers = #tpu.dot_dimension_numbers<[1], [0], [0], [1], [0, 0, 1, 1], [], []>} : vector<8x128xbf16>, vector<128x128xbf16>, vector<8x128xf32> -> vector<8x128xf32>
    %c0_14 = arith.constant 0 : index
    %c0_15 = arith.constant 0 : index
    %57 = vector.load %arg6[%c0_14, %c0_15] : memref<1x128xf32, #tpu.memory_space<vmem>>, vector<1x128xf32>
    %58 = vector.broadcast %57 : vector<1x128xf32> to vector<8x128xf32>
    %59 = arith.addf %56, %58 : vector<8x128xf32>
    %c0_16 = arith.constant 0 : index
    %c0_17 = arith.constant 0 : index
    %60 = vector.load %arg7[%c0_16, %c0_17] : memref<8x128xf32, #tpu.memory_space<vmem>>, vector<8x128xf32>
    tpu.vector_store %arg7[%c0_16, %c0_17], %59 {strides = array<i32>} : memref<8x128xf32, #tpu.memory_space<vmem>>, vector<8x128xf32>,
    return
  }
  func.func @transform_0(%arg0: i32, %arg1: memref<1xi32, #tpu.memory_space<smem>>) -> (i32, i32) {
    %c0_i32 = arith.constant 0 : i32
    %c0_i32_0 = arith.constant 0 : i32
    return %arg0, %c0_i32 : i32, i32
  }
  func.func @transform_1(%arg0: i32, %arg1: memref<1xi32, #tpu.memory_space<smem>>) -> (i32, i32) {
    %c0_i32 = arith.constant 0 : i32
    %c0_i32_0 = arith.constant 0 : i32
    %c0_i32_1 = arith.constant 0 : i32
    return %c0_i32, %c0_i32_0 : i32, i32
  }
  func.func @transform_2(%arg0: i32, %arg1: memref<1xi32, #tpu.memory_space<smem>>) -> (i32, i32) {
    %c0_i32 = arith.constant 0 : i32
    %c0_i32_0 = arith.constant 0 : i32
    %c0_i32_1 = arith.constant 0 : i32
    return %c0_i32, %c0_i32_0 : i32, i32
  }
  func.func @transform_3(%arg0: i32, %arg1: memref<1xi32, #tpu.memory_space<smem>>) -> (i32, i32) {
    %c0_i32 = arith.constant 0 : i32
    %c0_i32_0 = arith.constant 0 : i32
    %c0_i32_1 = arith.constant 0 : i32
    return %c0_i32, %c0_i32_0 : i32, i32
  }
  func.func @transform_4(%arg0: i32, %arg1: memref<1xi32, #tpu.memory_space<smem>>) -> (i32, i32) {
    %c0_i32 = arith.constant 0 : i32
    %c0_i32_0 = arith.constant 0 : i32
    %c0_i32_1 = arith.constant 0 : i32
    return %c0_i32, %c0_i32_0 : i32, i32
  }
  func.func @transform_5(%arg0: i32, %arg1: memref<1xi32, #tpu.memory_space<smem>>) -> (i32, i32) {
    %c0_i32 = arith.constant 0 : i32
    %c0_i32_0 = arith.constant 0 : i32
    return %arg0, %c0_i32 : i32, i32
  }
}

</mosaic_0001>

<llo_original>
// kernel: tpu_custom_call.1
$region0: #{tpu_custom_call.1}
  #allocation0 [shape = 'u32[]', space=smem, size = 0x4, offset = 0x4, fixed_abs, tag = 'smem constant byte address 0x4 - core index']
  #allocation1 [shape = 'u32[144,128]{1,0:T(1,128)}', space=vmem, size = 0x12000, scoped, tag = 'internal scratch']
  #allocation2 [shape = 's32[1]{0}', space=sflag, size = 0x4, scoped, tag = 'scoped memory for tpu_custom_call.1']
  #allocation3 [shape = 's32[1]{0:T(128)S(6)}', space=smem, size = 0x200, scoped, tag = 'prefetched SMEM operand 0']
  %s0 = inlined_call_operand.<no memory space> [shape: s32[1], index: 0, kind: input, shape index: {}]
  %s1 = inlined_call_operand.hbm [shape: f32[8,128], index: 1, kind: input, shape index: {}]
  %s2 = inlined_call_operand.hbm [shape: bf16[128,128], index: 2, kind: input, shape index: {}]
  %s3 = inlined_call_operand.vmem [shape: f32[1,128], index: 3, kind: input, shape index: {}]
  %s4 = inlined_call_operand.hbm [shape: bf16[128,128], index: 4, kind: input, shape index: {}]
  %s5 = inlined_call_operand.vmem [shape: f32[1,128], index: 5, kind: input, shape index: {}]
  %s6 = inlined_call_operand.hbm [shape: f32[8,128], index: 6, kind: output, shape index: {}]
  %s7 = sld [smem:[#allocation0]]
  $region42: #{tpu_custom_call.1} parent=0
    _
  %s9 = ssub.s32 1, %s7
  %s10 = scalar_select 0, %s9, %s7
  %11 = sst [smem:[#allocation3]] %s0
  $region1: #{tpu_custom_call.1} parent=0
    #allocation4 [shape = 'u8[4096]{0}', space=vmem, size = 0x1000, scoped, tag = 'input window, operand 1, single buffered']
    #allocation5 [shape = 's32[1]{0}', space=sflag, size = 0x4, scoped, tag = 'scoped memory for tpu_custom_call.1']
    #allocation6 [shape = 's32[1]{0}', space=sflag, size = 0x4, scoped, tag = 'scoped memory for tpu_custom_call.1']
    #allocation7 [shape = 'u8[32768]{0}', space=vmem, size = 0x8000, scoped, tag = 'input window, operand 2, single buffered']
    #allocation8 [shape = 's32[1]{0}', space=sflag, size = 0x4, scoped, tag = 'scoped memory for tpu_custom_call.1']
    #allocation9 [shape = 'u8[32768]{0}', space=vmem, size = 0x8000, scoped, tag = 'input window, operand 4, single buffered']
    #allocation10 [shape = 'u8[4096]{0}', space=vmem, size = 0x1000, scoped, tag = 'output window, operand 0, single buffered']
    %12 = vsyncpa [#allocation5], 0
    %13 = vsyncpa [#allocation8], 0
    %14 = vsyncpa [#allocation6], 0
    // Predicated region
    $region2: #{tpu_custom_call.1} parent=1 // pred_check
      _
    $region3: #{tpu_custom_call.1} parent=1 // pred_check_branch
      %16 = sbr.rel (0) target = $region5
    $region4: #{tpu_custom_call.1} parent=1 // pred_region
      %s18 = ssub.s32 128, 128
      %19 = vsyncadd [#allocation5], %s18
      %s21 = sshll.u32 [#allocation4], 4
      %s22 = int_to_ptr.vmem [resolvable:$true] %s21
      %24 = dma.hbm_to_vmem [thread:$0]  %s1, 128, %s22, [#allocation5]
    $region5: #{tpu_custom_call.1} parent=1 // pred_fallthru
      _
    // Predicated region
    $region6: #{tpu_custom_call.1} parent=1 // pred_check
      _
    $region7: #{tpu_custom_call.1} parent=1 // pred_check_branch
      %26 = sbr.rel (0) target = $region9
    $region8: #{tpu_custom_call.1} parent=1 // pred_region
      %s28 = ssub.s32 1024, 1024
      %29 = vsyncadd [#allocation8], %s28
      %s30 = sshll.u32 [#allocation7], 4
      %s31 = int_to_ptr.vmem [resolvable:$true] %s30
      %36 = dma.hbm_to_vmem [thread:$0]  %s2, 1024, %s31, [#allocation8], 64, 64, 4
    $region9: #{tpu_custom_call.1} parent=1 // pred_fallthru
      _
    // Predicated region
    $region10: #{tpu_custom_call.1} parent=1 // pred_check
      _
    $region11: #{tpu_custom_call.1} parent=1 // pred_check_branch
      %38 = sbr.rel (0) target = $region13
    $region12: #{tpu_custom_call.1} parent=1 // pred_region
      _
    $region13: #{tpu_custom_call.1} parent=1 // pred_fallthru
      _
    // Predicated region
    $region14: #{tpu_custom_call.1} parent=1 // pred_check
      _
    $region15: #{tpu_custom_call.1} parent=1 // pred_check_branch
      %40 = sbr.rel (0) target = $region17
    $region16: #{tpu_custom_call.1} parent=1 // pred_region
      %s42 = ssub.s32 1024, 1024
      %43 = vsyncadd [#allocation8], %s42
      %s44 = sshll.u32 [#allocation9], 4
      %s45 = int_to_ptr.vmem [resolvable:$true] %s44
      %50 = dma.hbm_to_vmem [thread:$0]  %s4, 1024, %s45, [#allocation8], 64, 64, 4
    $region17: #{tpu_custom_call.1} parent=1 // pred_fallthru
      _
    // Predicated region
    $region18: #{tpu_custom_call.1} parent=1 // pred_check
      _
    $region19: #{tpu_custom_call.1} parent=1 // pred_check_branch
      %52 = sbr.rel (0) target = $region21
    $region20: #{tpu_custom_call.1} parent=1 // pred_region
      _
    $region21: #{tpu_custom_call.1} parent=1 // pred_fallthru
      _
    // Predicated region
    $region22: #{tpu_custom_call.1} parent=1 // pred_check
      _
    $region23: #{tpu_custom_call.1} parent=1 // pred_check_branch
      %54 = sbr.rel (0) target = $region25
    $region24: #{tpu_custom_call.1} parent=1 // pred_region
      %55 = dma.done [#allocation5], 128
    $region25: #{tpu_custom_call.1} parent=1 // pred_fallthru
      _
    // Predicated region
    $region26: #{tpu_custom_call.1} parent=1 // pred_check
      _
    $region27: #{tpu_custom_call.1} parent=1 // pred_check_branch
      %57 = sbr.rel (0) target = $region29
    $region28: #{tpu_custom_call.1} parent=1 // pred_region
      %58 = dma.done [#allocation8], 1024
    $region29: #{tpu_custom_call.1} parent=1 // pred_fallthru
      _
    // Predicated region
    $region30: #{tpu_custom_call.1} parent=1 // pred_check
      _
    $region31: #{tpu_custom_call.1} parent=1 // pred_check_branch
      %60 = sbr.rel (0) target = $region33
    $region32: #{tpu_custom_call.1} parent=1 // pred_region
      %61 = dma.done [#allocation8], 1024
    $region33: #{tpu_custom_call.1} parent=1 // pred_fallthru
      _
    %v63 = vld [vmem:[#allocation4] sm:$0xff]
    %v64 = vpack.c.bf16 %v63, %v63
    %v65 = vld [vmem:[#allocation7] sm:$0xf]
    %v66 = vld [vmem:[#allocation7 + $0x4] sm:$0xf]
    %v67 = vld [vmem:[#allocation7 + $0x8] sm:$0xf]
    %v68 = vld [vmem:[#allocation7 + $0xc] sm:$0xf]
    %v69 = vld [vmem:[#allocation7 + $0x10] sm:$0xf]
    %v70 = vld [vmem:[#allocation7 + $0x14] sm:$0xf]
    %v71 = vld [vmem:[#allocation7 + $0x18] sm:$0xf]
    %v72 = vld [vmem:[#allocation7 + $0x1c] sm:$0xf]
    %v73 = vld [vmem:[#allocation7 + $0x20] sm:$0xf]
    %v74 = vld [vmem:[#allocation7 + $0x24] sm:$0xf]
    %v75 = vld [vmem:[#allocation7 + $0x28] sm:$0xf]
    %v76 = vld [vmem:[#allocation7 + $0x2c] sm:$0xf]
    %v77 = vld [vmem:[#allocation7 + $0x30] sm:$0xf]
    %v78 = vld [vmem:[#allocation7 + $0x34] sm:$0xf]
    %v79 = vld [vmem:[#allocation7 + $0x38] sm:$0xf]
    %v80 = vld [vmem:[#allocation7 + $0x3c] sm:$0xf]
    %v81 = vld [vmem:[%s3] sm:$0x1]
    %v83 = vlaneseq
    %v84 = vshrl.u32 %v83, 7
    %v85 = vsub.s32 0, %v84
    %v86 = vrot.slane %v81, %v85
    %v104 = vunpack.c.l.b16 %v65
    %v105 = vunpack.c.l.b16 %v66
    %v106 = vunpack.c.l.b16 %v67
    %v107 = vunpack.c.l.b16 %v68
    %v108 = vunpack.c.l.b16 %v69
    %v109 = vunpack.c.l.b16 %v70
    %v110 = vunpack.c.l.b16 %v71
    %v111 = vunpack.c.l.b16 %v72
    %v112 = vunpack.c.l.b16 %v73
    %v113 = vunpack.c.l.b16 %v74
    %v114 = vunpack.c.l.b16 %v75
    %v115 = vunpack.c.l.b16 %v76
    %v116 = vunpack.c.l.b16 %v77
    %v117 = vunpack.c.l.b16 %v78
    %v118 = vunpack.c.l.b16 %v79
    %v119 = vunpack.c.l.b16 %v80
    %v120 = vpack.c.b16 %v105, %v104
    %v121 = vpack.c.b16 %v107, %v106
    %v122 = vpack.c.b16 %v109, %v108
    %v123 = vpack.c.b16 %v111, %v110
    %v124 = vpack.c.b16 %v113, %v112
    %v125 = vpack.c.b16 %v115, %v114
    %v126 = vpack.c.b16 %v117, %v116
    %v127 = vpack.c.b16 %v119, %v118
    %136 = vmatprep.subr.bf16.mxu0 0
    %137 = vmatpush1.bf16.msra.mxu0 %v120
    %138 = vmatprep.subr.bf16.mxu0 0
    %139 = vmatpush1.bf16.msra.mxu0 %v121
    %140 = vmatprep.subr.bf16.mxu0 0
    %141 = vmatpush1.bf16.msra.mxu0 %v122
    %142 = vmatprep.subr.bf16.mxu0 0
    %143 = vmatpush1.bf16.msra.mxu0 %v123
    %144 = vmatprep.subr.bf16.mxu0 0
    %145 = vmatpush1.bf16.msra.mxu0 %v124
    %146 = vmatprep.subr.bf16.mxu0 0
    %147 = vmatpush1.bf16.msra.mxu0 %v125
    %148 = vmatprep.subr.bf16.mxu0 0
    %149 = vmatpush1.bf16.msra.mxu0 %v126
    %150 = vmatprep.subr.bf16.mxu0 0
    %151 = vmatpush1.bf16.msra.mxu0 %v127
    %152 = vmatprep.subr.bf16.mxu0 0
    %153 = vmatpush1.bf16.msra.mxu0 0
    %154 = vmatprep.subr.bf16.mxu0 0
    %155 = vmatpush1.bf16.msra.mxu0 0
    %156 = vmatprep.subr.bf16.mxu0 0
    %157 = vmatpush1.bf16.msra.mxu0 0
    %158 = vmatprep.subr.bf16.mxu0 0
    %159 = vmatpush1.bf16.msra.mxu0 0
    %160 = vmatprep.subr.bf16.mxu0 0
    %161 = vmatpush1.bf16.msra.mxu0 0
    %162 = vmatprep.subr.bf16.mxu0 0
    %163 = vmatpush1.bf16.msra.mxu0 0
    %164 = vmatprep.subr.bf16.mxu0 0
    %165 = vmatpush1.bf16.msra.mxu0 0
    %166 = vmatprep.subr.bf16.mxu0 0
    %167 = vmatpush1.bf16.msra.mxu0 0
    %168 = vmatprep.mubr.bf16.mxu0 0
    %169 = vmatmul.mubr.bf16.gmra.mrb[0].mxu0 %v64
    %v170 = vpop.f32.mrb[0].mxu0
    %v171 = vadd.f32 %v86, %v170
    %v172 = vpop.f32.mrb[0].mxu0
    %v173 = vpop.f32.mrb[0].mxu0
    %v174 = vpop.f32.mrb[0].mxu0
    %175 = vdwg.mxu0
    %v176 = vmax.f32 %v171, 0.0
    %vm177 = vcmp.ne.f32.partialorder %v171, %v171
    %v178 = vadd.f32 %v171, 0.0
    %v179 = vand.u32 2147483647, %v171
    %v180 = vsub.f32 0.0, %v179
    %v181 = vmul.f32 %v180, 1.442695
    %v182 = vpow.pop %v181
    %v183 = vadd.f32 %v182, 1.0
    %v184 = vlog2.pop %v183
    %v185 = vmul.f32 %v184, 0.6931472
    %v186 = vmul.f32 -0.5, %v182
    %v187 = vadd.f32 %v186, 1.0
    %v188 = vmul.f32 %v187, %v182
    %v189 = vand.u32 2147483647, %v182
    %vm190 = vcmp.lt.f32.partialorder %v189, 0.0004427343
    %v191 = vsel %vm190, %v188, %v185
    %v192 = vadd.f32 %v176, %v191
    %v193 = vsel %vm177, %v178, %v192
    %v194 = vtanh.pop %v193
    %v195 = vmul.f32 %v171, %v194
    %v196 = vlaneseq
    %v197 = vshrl.u32 %v196, 7
    %v198 = vlaneseq
    %v199 = vand.u32 %v198, 127
    %s200 = smul.u32 0, 8
    %v201 = vstv %s200
    %v202 = vadd.s32 %v197, %v201
    %v203 = vmul.u32 %v202, 128
    %v204 = vadd.s32 %v203, %v199
    %s205 = sld [smem:[#allocation3]]
    %s206 = smul.u32 %s205, 2654435769
    %v207 = vstv %s206
    %v208 = vadd.s32 %v204, %v207
    %v209 = vshrl.u32 %v208, 16
    %v210 = vxor.u32 %v208, %v209
    %v211 = vmul.u32 %v210, 2146121005
    %v212 = vshrl.u32 %v211, 15
    %v213 = vxor.u32 %v211, %v212
    %v214 = vmul.u32 %v213, 2221713035
    %v215 = vshrl.u32 %v214, 16
    %v216 = vxor.u32 %v214, %v215
    %vm217 = vcmp.ge.u32.totalorder %v216, 2147483648
    %v218 = vmul.f32 %v195, 2.0
    %v219 = vsel %vm217, %v218, 0.0
    %v220 = vpack.c.bf16 %v219, %v219
    %v221 = vld [vmem:[#allocation9] sm:$0xf]
    %v222 = vld [vmem:[#allocation9 + $0x4] sm:$0xf]
    %v223 = vld [vmem:[#allocation9 + $0x8] sm:$0xf]
    %v224 = vld [vmem:[#allocation9 + $0xc] sm:$0xf]
    %v225 = vld [vmem:[#allocation9 + $0x10] sm:$0xf]
    %v226 = vld [vmem:[#allocation9 + $0x14] sm:$0xf]
    %v227 = vld [vmem:[#allocation9 + $0x18] sm:$0xf]
    %v228 = vld [vmem:[#allocation9 + $0x1c] sm:$0xf]
    %v229 = vld [vmem:[#allocation9 + $0x20] sm:$0xf]
    %v230 = vld [vmem:[#allocation9 + $0x24] sm:$0xf]
    %v231 = vld [vmem:[#allocation9 + $0x28] sm:$0xf]
    %v232 = vld [vmem:[#allocation9 + $0x2c] sm:$0xf]
    %v233 = vld [vmem:[#allocation9 + $0x30] sm:$0xf]
    %v234 = vld [vmem:[#allocation9 + $0x34] sm:$0xf]
    %v235 = vld [vmem:[#allocation9 + $0x38] sm:$0xf]
    %v236 = vld [vmem:[#allocation9 + $0x3c] sm:$0xf]
    %v237 = vld [vmem:[%s5] sm:$0x1]
    %v239 = vlaneseq
    %v240 = vshrl.u32 %v239, 7
    %v241 = vsub.s32 0, %v240
    %v242 = vrot.slane %v237, %v241
    %v260 = vunpack.c.l.b16 %v221
    %v261 = vunpack.c.l.b16 %v222
    %v262 = vunpack.c.l.b16 %v223
    %v263 = vunpack.c.l.b16 %v224
    %v264 = vunpack.c.l.b16 %v225
    %v265 = vunpack.c.l.b16 %v226
    %v266 = vunpack.c.l.b16 %v227
    %v267 = vunpack.c.l.b16 %v228
    %v268 = vunpack.c.l.b16 %v229
    %v269 = vunpack.c.l.b16 %v230
    %v270 = vunpack.c.l.b16 %v231
    %v271 = vunpack.c.l.b16 %v232
    %v272 = vunpack.c.l.b16 %v233
    %v273 = vunpack.c.l.b16 %v234
    %v274 = vunpack.c.l.b16 %v235
    %v275 = vunpack.c.l.b16 %v236
    %v276 = vpack.c.b16 %v261, %v260
    %v277 = vpack.c.b16 %v263, %v262
    %v278 = vpack.c.b16 %v265, %v264
    %v279 = vpack.c.b16 %v267, %v266
    %v280 = vpack.c.b16 %v269, %v268
    %v281 = vpack.c.b16 %v271, %v270
    %v282 = vpack.c.b16 %v273, %v272
    %v283 = vpack.c.b16 %v275, %v274
    %292 = vmatprep.subr.bf16.mxu0 0
    %293 = vmatpush1.bf16.msra.mxu0 %v276
    %294 = vmatprep.subr.bf16.mxu0 0
    %295 = vmatpush1.bf16.msra.mxu0 %v277
    %296 = vmatprep.subr.bf16.mxu0 0
    %297 = vmatpush1.bf16.msra.mxu0 %v278
    %298 = vmatprep.subr.bf16.mxu0 0
    %299 = vmatpush1.bf16.msra.mxu0 %v279
    %300 = vmatprep.subr.bf16.mxu0 0
    %301 = vmatpush1.bf16.msra.mxu0 %v280
    %302 = vmatprep.subr.bf16.mxu0 0
    %303 = vmatpush1.bf16.msra.mxu0 %v281
    %304 = vmatprep.subr.bf16.mxu0 0
    %305 = vmatpush1.bf16.msra.mxu0 %v282
    %306 = vmatprep.subr.bf16.mxu0 0
    %307 = vmatpush1.bf16.msra.mxu0 %v283
    %308 = vmatprep.subr.bf16.mxu0 0
    %309 = vmatpush1.bf16.msra.mxu0 0
    %310 = vmatprep.subr.bf16.mxu0 0
    %311 = vmatpush1.bf16.msra.mxu0 0
    %312 = vmatprep.subr.bf16.mxu0 0
    %313 = vmatpush1.bf16.msra.mxu0 0
    %314 = vmatprep.subr.bf16.mxu0 0
    %315 = vmatpush1.bf16.msra.mxu0 0
    %316 = vmatprep.subr.bf16.mxu0 0
    %317 = vmatpush1.bf16.msra.mxu0 0
    %318 = vmatprep.subr.bf16.mxu0 0
    %319 = vmatpush1.bf16.msra.mxu0 0
    %320 = vmatprep.subr.bf16.mxu0 0
    %321 = vmatpush1.bf16.msra.mxu0 0
    %322 = vmatprep.subr.bf16.mxu0 0
    %323 = vmatpush1.bf16.msra.mxu0 0
    %324 = vmatprep.mubr.bf16.mxu0 0
    %325 = vmatmul.mubr.bf16.gmra.mrb[0].mxu0 %v220
    %v326 = vpop.f32.mrb[0].mxu0
    %v327 = vadd.f32 %v242, %v326
    %v328 = vpop.f32.mrb[0].mxu0
    %v329 = vpop.f32.mrb[0].mxu0
    %v330 = vpop.f32.mrb[0].mxu0
    %331 = vdwg.mxu0
    %332 = vst [vmem:[#allocation10] sm:$0xff] %v327
    // Predicated region
    $region34: #{tpu_custom_call.1} parent=1 // pred_check
      _
    $region35: #{tpu_custom_call.1} parent=1 // pred_check_branch
      %334 = sbr.rel (0) target = $region37
    $region36: #{tpu_custom_call.1} parent=1 // pred_region
      %s336 = ssub.s32 128, 128
      %337 = vsyncadd [#allocation6], %s336
      %s339 = sshll.u32 [#allocation10], 4
      %s340 = int_to_ptr.vmem [resolvable:$true] %s339
      %342 = dma.vmem_to_hbm [thread:$0]  %s340, 128, %s6, [#allocation6]
    $region37: #{tpu_custom_call.1} parent=1 // pred_fallthru
      _
    // Predicated region
    $region38: #{tpu_custom_call.1} parent=1 // pred_check
      _
    $region39: #{tpu_custom_call.1} parent=1 // pred_check_branch
      %344 = sbr.rel (0) target = $region41
    $region40: #{tpu_custom_call.1} parent=1 // pred_region
      %345 = dma.done [#allocation6], 128
    $region41: #{tpu_custom_call.1} parent=1 // pred_fallthru
      _
    %346 = vsyncpa [#allocation5], 1
    %347 = vsyncpa [#allocation8], 1
    %348 = vsyncpa [#allocation6], 1

</llo_original>
